<compile_context>
chip_gen: v7x
topology: tpu7x:2x2x1
jax: 0.10.0
libtpu: 0.0.40
codegen_flags: <defaults>
</compile_context>

<pallas_src>
import jax
import jax.numpy as jnp
from jax import lax
from jax.experimental import pallas as pl
from jax.experimental.pallas import tpu as pltpu

EPS = 1e-8  # PyTorch F.cosine_similarity default eps


def _round_up(v, m):
    return ((v + m - 1) // m) * m


def _vmem_capacity_bytes():
    try:
        return int(pltpu.get_tpu_info().vmem_capacity_bytes)
    except Exception:
        return 64 * 1024 * 1024  # conservative fallback: v7x per-TensorCore VMEM


def _cosine_sim_kernel(x_ref, ref_ref, w_ref, b_ref, o_ref):
    # x_ref:   (tn, Dp)  tile of x (native / mxu dtype -> MXU)
    # ref_ref: (tn, Dp)  tile of ref
    # w_ref:   (Dp, Dp)  Linear weight, torch (out, in) layout, resident (single copy)
    # b_ref:   (1,  Dp)  Linear bias (f32), resident
    # o_ref:   (1,  tn)  lane-dense cosine similarity for this tile
    x = x_ref[...]
    w = w_ref[...]
    r = ref_ref[...].astype(jnp.float32)

    # y = x @ W.T + b ; transpose folded into the contraction, f32 accumulation.
    y = lax.dot_general(
        x, w,
        dimension_numbers=(((1,), (1,)), ((), ())),
        preferred_element_type=jnp.float32,
    ) + b_ref[...].astype(jnp.float32)

    # cosine_similarity along the feature dim; keep all reductions in f32 (VPU).
    dot = jnp.sum(y * r, axis=-1, keepdims=True)       # (tn, 1)
    ny2 = jnp.sum(y * y, axis=-1, keepdims=True)
    nr2 = jnp.sum(r * r, axis=-1, keepdims=True)
    # max(sqrt(s), eps) == sqrt(max(s, eps^2))  ->  rsqrt on the EUP, no divide.
    inv = lax.rsqrt(jnp.maximum(ny2, EPS * EPS)) * lax.rsqrt(jnp.maximum(nr2, EPS * EPS))
    cos = dot * inv                                     # (tn, 1)

    # Lane-dense store: one (1, tn) row per grid step.
    o_ref[...] = cos.reshape(o_ref.shape).astype(o_ref.dtype)


def cosine_similarity_forward(x, ref, weight, bias, *, tn=None, mxu_dtype=None):
    """x, ref: (N, D); weight: (D, D) torch Linear layout (out, in); bias: (D,).

    mxu_dtype: optionally cast x and weight (MXU operands) to this dtype (e.g.
    jnp.bfloat16) to halve their HBM traffic; reductions stay f32.
    """
    N, D = x.shape
    assert ref.shape == (N, D)
    assert weight.shape == (D, D) and bias.shape == (D,)

    if mxu_dtype is not None:
        x = x.astype(mxu_dtype)
        weight = weight.astype(mxu_dtype)

    Dp = _round_up(D, 128)
    x_item = jnp.dtype(x.dtype).itemsize
    r_item = jnp.dtype(ref.dtype).itemsize
    w_item = jnp.dtype(weight.dtype).itemsize

    vmem_cap = _vmem_capacity_bytes()

    # ---- batch-tile selection (generation aware) -----------------------------
    if tn is None:
        tn = 1024 if vmem_cap >= 96 * 1024 * 1024 else 512  # v5e/v6e vs v7x

    Nq = _round_up(N, 8)
    tn = max(8, min(tn, Nq))
    if N >= 128:
        # Lane-aligned tiles so the (1, tn) output block stays legal/unmasked
        # even with multiple grid steps.
        tn = min(_round_up(tn, 128), _round_up(Nq, 128))

    weight_bytes = Dp * Dp * w_item + Dp * 4  # single-buffered resident weight + f32 bias

    def working_set(t):
        # resident weight + double-buffered x/ref tiles + double-buffered output row
        return weight_bytes + 2 * t * Dp * (x_item + r_item) + 2 * t * 4

    # Shrink the tile if the working set would crowd VMEM (leave room for the
    # f32 intermediates and compiler scratch).
    budget = int(0.40 * vmem_cap)
    while tn > 128 and working_set(tn) > budget:
        tn = max(128, _round_up(tn // 2, 128))

    # Guarantee >= 2 grid steps when there is enough batch, so both v7x
    # TensorCores get work under dimension_semantics=("parallel",).
    if N >= 256:
        tn = min(tn, _round_up(pl.cdiv(Nq, 2), 128))

    Np = _round_up(Nq, tn)
    num_tiles = Np // tn

    # ---- padding --------------------------------------------------------------
    if Dp != D:
        x = jnp.pad(x, ((0, 0), (0, Dp - D)))
        ref = jnp.pad(ref, ((0, 0), (0, Dp - D)))
        weight = jnp.pad(weight, ((0, Dp - D), (0, Dp - D)))
        bias = jnp.pad(bias, (0, Dp - D))
    if Np != N:
        x = jnp.pad(x, ((0, Np - N), (0, 0)))
        ref = jnp.pad(ref, ((0, Np - N), (0, 0)))

    b2 = bias.astype(jnp.float32).reshape(1, Dp)

    # ---- cost estimate & VMEM limit -------------------------------------------
    flops = 2 * Np * Dp * Dp + 8 * Np * Dp
    bytes_accessed = (Np * Dp * (x_item + r_item) + Dp * Dp * w_item + Dp * 4 + Np * 4)
    cost = pl.CostEstimate(flops=flops, transcendentals=2 * Np,
                           bytes_accessed=bytes_accessed)

    intermediates = 4 * tn * Dp * 4  # y + elementwise f32 temps
    vmem_need = working_set(tn) + intermediates + (4 << 20)
    vmem_limit = int(min(max(vmem_need, 32 << 20), int(0.85 * vmem_cap)))

    out = pl.pallas_call(
        _cosine_sim_kernel,
        out_shape=jax.ShapeDtypeStruct((1, Np), jnp.float32),
        grid=(num_tiles,),
        in_specs=[
            pl.BlockSpec((tn, Dp), lambda i: (i, 0)),              # x tile (pipelined)
            pl.BlockSpec((tn, Dp), lambda i: (i, 0)),              # ref tile (pipelined)
            pl.BlockSpec(memory_space=pltpu.MemorySpace.VMEM),     # weight: one resident copy
            pl.BlockSpec(memory_space=pltpu.MemorySpace.VMEM),     # bias: one resident copy
        ],
        out_specs=pl.BlockSpec((1, tn), lambda i: (0, i)),         # lane-dense, legal block
        compiler_params=pltpu.CompilerParams(
            dimension_semantics=("parallel",),
            vmem_limit_bytes=vmem_limit,
        ),
        cost_estimate=cost,
    )(x, ref, weight, b2)

    # (1, Np) -> (N, 1), dropping padded tail rows.
    return out.reshape(Np)[:N].reshape(N, 1)


def _reference(x, ref, weight, bias):
    y = lax.dot_general(
        x, weight,
        dimension_numbers=(((1,), (1,)), ((), ())),
        precision=lax.Precision.HIGHEST,
        preferred_element_type=jnp.float32,
    ) + bias
    dot = jnp.sum(y * ref, axis=-1)
    ny = jnp.sqrt(jnp.sum(y * y, axis=-1))
    nr = jnp.sqrt(jnp.sum(ref * ref, axis=-1))
    return (dot / (jnp.maximum(ny, EPS) * jnp.maximum(nr, EPS))).reshape(-1, 1)


if __name__ == "__main__":
    N, D = 16, 32   # batch rows, in_size
    key = jax.random.PRNGKey(0)
    kx, kr, kw, kb = jax.random.split(key, 4)

    x = jax.random.normal(kx, (N, D), dtype=jnp.float32)
    ref = jax.random.normal(kr, (N, D), dtype=jnp.float32)
    # deterministic Linear(in_size, in_size) params (synthetic init)
    bound = 1.0 / jnp.sqrt(D)
    weight = jax.random.uniform(kw, (D, D), minval=-bound, maxval=bound, dtype=jnp.float32)
    bias = jax.random.uniform(kb, (D,), minval=-bound, maxval=bound, dtype=jnp.float32)

    expected = _reference(x, ref, weight, bias)

    # f32 path (tight check)
    out = jax.block_until_ready(cosine_similarity_forward(x, ref, weight, bias))
    assert out.shape == (N, 1)
    assert jnp.allclose(out, expected, atol=1e-5, rtol=1e-5), (out, expected)

    # bf16 MXU-feed path (halves HBM traffic for x/weight; f32 reductions inside)
    out_bf16 = jax.block_until_ready(
        cosine_similarity_forward(x, ref, weight, bias, mxu_dtype=jnp.bfloat16))
    assert out_bf16.shape == (N, 1)
    assert jnp.allclose(out_bf16, expected, atol=5e-2), (out_bf16, expected)

    print("KERNEL_OK")
</pallas_src>

<mosaic_0001>
module attributes {stable_mosaic.version = 11 : i64} {
  func.func @_cosine_sim_kernel(%arg0: i32, %arg1: memref<16x128xf32, #tpu.memory_space<vmem>>, %arg2: memref<16x128xf32, #tpu.memory_space<vmem>>, %arg3: memref<128x128xf32, #tpu.memory_space<vmem>>, %arg4: memref<1x128xf32, #tpu.memory_space<vmem>>, %arg5: memref<1x16xf32, #tpu.memory_space<vmem>>) attributes {dimension_semantics = [#tpu.dimension_semantics<parallel>], iteration_bounds = array<i64: 1>, scalar_prefetch = 0 : i64, scratch_operands = 0 : i64, tpu.core_type = #tpu.core_type<tc>, window_params = [{transform_indices = @transform_0, window_bounds = array<i64: 16, 128>}, {transform_indices = @transform_1, window_bounds = array<i64: 16, 128>}, {pipeline_mode = #tpu.pipeline_mode<synchronous>, transform_indices = @transform_2, window_bounds = array<i64: 128, 128>}, {pipeline_mode = #tpu.pipeline_mode<synchronous>, transform_indices = @transform_3, window_bounds = array<i64: 1, 128>}, {transform_indices = @transform_4, window_bounds = array<i64: 1, 16>}]} {
    %c0 = arith.constant 0 : index
    %c0_0 = arith.constant 0 : index
    %0 = vector.load %arg1[%c0, %c0_0] : memref<16x128xf32, #tpu.memory_space<vmem>>, vector<16x128xf32>
    %c0_1 = arith.constant 0 : index
    %c0_2 = arith.constant 0 : index
    %1 = vector.load %arg3[%c0_1, %c0_2] : memref<128x128xf32, #tpu.memory_space<vmem>>, vector<128x128xf32>
    %c0_3 = arith.constant 0 : index
    %c0_4 = arith.constant 0 : index
    %2 = vector.load %arg2[%c0_3, %c0_4] : memref<16x128xf32, #tpu.memory_space<vmem>>, vector<16x128xf32>
    %cst = arith.constant dense<0.000000e+00> : vector<16x128xf32>
    %3 = tpu.matmul %0, %1, %cst {dimension_numbers = #tpu.dot_dimension_numbers<[1], [1], [0], [0], [0, 0, 1, 0], [], []>} : vector<16x128xf32>, vector<128x128xf32>, vector<16x128xf32> -> vector<16x128xf32>
    %c0_5 = arith.constant 0 : index
    %c0_6 = arith.constant 0 : index
    %4 = vector.load %arg4[%c0_5, %c0_6] : memref<1x128xf32, #tpu.memory_space<vmem>>, vector<1x128xf32>
    %5 = vector.broadcast %4 : vector<1x128xf32> to vector<16x128xf32>
    %6 = arith.addf %3, %5 : vector<16x128xf32>
    %7 = arith.mulf %6, %2 : vector<16x128xf32>
    %cst_7 = arith.constant dense<0.000000e+00> : vector<16xf32>
    %8 = vector.multi_reduction <add>, %7, %cst_7 [1] : vector<16x128xf32> to vector<16xf32>
    %9 = vector.shape_cast %8 : vector<16xf32> to vector<16x1xf32>
    %10 = arith.mulf %6, %6 : vector<16x128xf32>
    %cst_8 = arith.constant dense<0.000000e+00> : vector<16xf32>
    %11 = vector.multi_reduction <add>, %10, %cst_8 [1] : vector<16x128xf32> to vector<16xf32>
    %12 = vector.shape_cast %11 : vector<16xf32> to vector<16x1xf32>
    %13 = arith.mulf %2, %2 : vector<16x128xf32>
    %cst_9 = arith.constant dense<0.000000e+00> : vector<16xf32>
    %14 = vector.multi_reduction <add>, %13, %cst_9 [1] : vector<16x128xf32> to vector<16xf32>
    %15 = vector.shape_cast %14 : vector<16xf32> to vector<16x1xf32>
    %cst_10 = arith.constant 1.000000e-16 : f32
    %16 = vector.broadcast %cst_10 : f32 to vector<16x1xf32>
    %17 = arith.maximumf %12, %16 : vector<16x1xf32>
    %18 = math.rsqrt %17 : vector<16x1xf32>
    %cst_11 = arith.constant 1.000000e-16 : f32
    %19 = vector.broadcast %cst_11 : f32 to vector<16x1xf32>
    %20 = arith.maximumf %15, %19 : vector<16x1xf32>
    %21 = math.rsqrt %20 : vector<16x1xf32>
    %22 = arith.mulf %18, %21 : vector<16x1xf32>
    %23 = arith.mulf %9, %22 : vector<16x1xf32>
    %24 = vector.shape_cast %23 : vector<16x1xf32> to vector<1x16xf32>
    %c0_12 = arith.constant 0 : index
    %c0_13 = arith.constant 0 : index
    %25 = vector.load %arg5[%c0_12, %c0_13] : memref<1x16xf32, #tpu.memory_space<vmem>>, vector<1x16xf32>
    tpu.vector_store %arg5[%c0_12, %c0_13], %24 {strides = array<i32>} : memref<1x16xf32, #tpu.memory_space<vmem>>, vector<1x16xf32>,
    return
  }
  func.func @transform_0(%arg0: i32) -> (i32, i32) {
    %c0_i32 = arith.constant 0 : i32
    %c0_i32_0 = arith.constant 0 : i32
    return %arg0, %c0_i32 : i32, i32
  }
  func.func @transform_1(%arg0: i32) -> (i32, i32) {
    %c0_i32 = arith.constant 0 : i32
    %c0_i32_0 = arith.constant 0 : i32
    return %arg0, %c0_i32 : i32, i32
  }
  func.func @transform_2(%arg0: i32) -> (i32, i32) {
    %c0_i32 = arith.constant 0 : i32
    %c0_i32_0 = arith.constant 0 : i32
    %c0_i32_1 = arith.constant 0 : i32
    return %c0_i32, %c0_i32_0 : i32, i32
  }
  func.func @transform_3(%arg0: i32) -> (i32, i32) {
    %c0_i32 = arith.constant 0 : i32
    %c0_i32_0 = arith.constant 0 : i32
    %c0_i32_1 = arith.constant 0 : i32
    return %c0_i32, %c0_i32_0 : i32, i32
  }
  func.func @transform_4(%arg0: i32) -> (i32, i32) {
    %c0_i32 = arith.constant 0 : i32
    %c0_i32_0 = arith.constant 0 : i32
    return %c0_i32, %arg0 : i32, i32
  }
}

</mosaic_0001>

<llo_original>
// kernel: tpu_custom_call.1
$region0: #{tpu_custom_call.1}
  #allocation0 [shape = 'u32[]', space=smem, size = 0x4, offset = 0x4, fixed_abs, tag = 'smem constant byte address 0x4 - core index']
  #allocation1 [shape = 'u32[144,128]{1,0:T(1,128)}', space=vmem, size = 0x12000, scoped, tag = 'internal scratch']
  %s0 = inlined_call_operand.hbm [shape: f32[16,128], index: 0, kind: input, shape index: {}]
  %s1 = inlined_call_operand.hbm [shape: f32[16,128], index: 1, kind: input, shape index: {}]
  %s2 = inlined_call_operand.hbm [shape: f32[128,128], index: 2, kind: input, shape index: {}]
  %s3 = inlined_call_operand.vmem [shape: f32[1,128], index: 3, kind: input, shape index: {}]
  %s4 = inlined_call_operand.hbm [shape: f32[1,16], index: 4, kind: output, shape index: {}]
  %s5 = sld [smem:[#allocation0]]
  $region38: #{tpu_custom_call.1} parent=0
    _
  %s7 = ssub.s32 1, %s5
  %s8 = scalar_select 0, %s7, %s5
  $region1: #{tpu_custom_call.1} parent=0
    #allocation2 [shape = 'u8[8192]{0}', space=vmem, size = 0x2000, scoped, tag = 'input window, operand 0, single buffered']
    #allocation3 [shape = 's32[1]{0}', space=sflag, size = 0x4, scoped, tag = 'scoped memory for tpu_custom_call.1']
    #allocation4 [shape = 's32[1]{0}', space=sflag, size = 0x4, scoped, tag = 'scoped memory for tpu_custom_call.1']
    #allocation5 [shape = 'u8[8192]{0}', space=vmem, size = 0x2000, scoped, tag = 'input window, operand 1, single buffered']
    #allocation6 [shape = 's32[1]{0}', space=sflag, size = 0x4, scoped, tag = 'scoped memory for tpu_custom_call.1']
    #allocation7 [shape = 'u8[65536]{0}', space=vmem, size = 0x10000, scoped, tag = 'input window, operand 2, single buffered']
    #allocation8 [shape = 'u8[512]{0}', space=vmem, size = 0x400, scoped, tag = 'output window, operand 0, single buffered']
    %9 = vsyncpa [#allocation3], 0
    %10 = vsyncpa [#allocation6], 0
    %11 = vsyncpa [#allocation4], 0
    // Predicated region
    $region2: #{tpu_custom_call.1} parent=1 // pred_check
      _
    $region3: #{tpu_custom_call.1} parent=1 // pred_check_branch
      %13 = sbr.rel (0) target = $region5
    $region4: #{tpu_custom_call.1} parent=1 // pred_region
      %s15 = ssub.s32 256, 256
      %16 = vsyncadd [#allocation3], %s15
      %s17 = sshll.u32 [#allocation2], 4
      %s18 = int_to_ptr.vmem [resolvable:$true] %s17
      %23 = dma.hbm_to_vmem [thread:$0]  %s0, 256, %s18, [#allocation3], 128, 128, 8
    $region5: #{tpu_custom_call.1} parent=1 // pred_fallthru
      _
    // Predicated region
    $region6: #{tpu_custom_call.1} parent=1 // pred_check
      _
    $region7: #{tpu_custom_call.1} parent=1 // pred_check_branch
      %25 = sbr.rel (0) target = $region9
    $region8: #{tpu_custom_call.1} parent=1 // pred_region
      %s27 = ssub.s32 256, 256
      %28 = vsyncadd [#allocation6], %s27
      %s29 = sshll.u32 [#allocation5], 4
      %s30 = int_to_ptr.vmem [resolvable:$true] %s29
      %35 = dma.hbm_to_vmem [thread:$0]  %s1, 256, %s30, [#allocation6], 128, 128, 8
    $region9: #{tpu_custom_call.1} parent=1 // pred_fallthru
      _
    // Predicated region
    $region10: #{tpu_custom_call.1} parent=1 // pred_check
      _
    $region11: #{tpu_custom_call.1} parent=1 // pred_check_branch
      %37 = sbr.rel (0) target = $region13
    $region12: #{tpu_custom_call.1} parent=1 // pred_region
      %s39 = ssub.s32 2048, 2048
      %40 = vsyncadd [#allocation6], %s39
      %s41 = sshll.u32 [#allocation7], 4
      %s42 = int_to_ptr.vmem [resolvable:$true] %s41
      %47 = dma.hbm_to_vmem [thread:$0]  %s2, 2048, %s42, [#allocation6], 128, 128, 8
    $region13: #{tpu_custom_call.1} parent=1 // pred_fallthru
      _
    // Predicated region
    $region14: #{tpu_custom_call.1} parent=1 // pred_check
      _
    $region15: #{tpu_custom_call.1} parent=1 // pred_check_branch
      %49 = sbr.rel (0) target = $region17
    $region16: #{tpu_custom_call.1} parent=1 // pred_region
      _
    $region17: #{tpu_custom_call.1} parent=1 // pred_fallthru
      _
    // Predicated region
    $region18: #{tpu_custom_call.1} parent=1 // pred_check
      _
    $region19: #{tpu_custom_call.1} parent=1 // pred_check_branch
      %51 = sbr.rel (0) target = $region21
    $region20: #{tpu_custom_call.1} parent=1 // pred_region
      %52 = dma.done [#allocation3], 256
    $region21: #{tpu_custom_call.1} parent=1 // pred_fallthru
      _
    // Predicated region
    $region22: #{tpu_custom_call.1} parent=1 // pred_check
      _
    $region23: #{tpu_custom_call.1} parent=1 // pred_check_branch
      %54 = sbr.rel (0) target = $region25
    $region24: #{tpu_custom_call.1} parent=1 // pred_region
      %55 = dma.done [#allocation6], 256
    $region25: #{tpu_custom_call.1} parent=1 // pred_fallthru
      _
    // Predicated region
    $region26: #{tpu_custom_call.1} parent=1 // pred_check
      _
    $region27: #{tpu_custom_call.1} parent=1 // pred_check_branch
      %57 = sbr.rel (0) target = $region29
    $region28: #{tpu_custom_call.1} parent=1 // pred_region
      %58 = dma.done [#allocation6], 2048
    $region29: #{tpu_custom_call.1} parent=1 // pred_fallthru
      _
    %v59 = vld [vmem:[#allocation2] sm:$0xff]
    %v60 = vld [vmem:[#allocation2 + $0x8] sm:$0xff]
    %v61 = vld [vmem:[#allocation7] sm:$0xff]
    %v62 = vld [vmem:[#allocation7 + $0x8] sm:$0xff]
    %v63 = vld [vmem:[#allocation7 + $0x10] sm:$0xff]
    %v64 = vld [vmem:[#allocation7 + $0x18] sm:$0xff]
    %v65 = vld [vmem:[#allocation7 + $0x20] sm:$0xff]
    %v66 = vld [vmem:[#allocation7 + $0x28] sm:$0xff]
    %v67 = vld [vmem:[#allocation7 + $0x30] sm:$0xff]
    %v68 = vld [vmem:[#allocation7 + $0x38] sm:$0xff]
    %v69 = vld [vmem:[#allocation7 + $0x40] sm:$0xff]
    %v70 = vld [vmem:[#allocation7 + $0x48] sm:$0xff]
    %v71 = vld [vmem:[#allocation7 + $0x50] sm:$0xff]
    %v72 = vld [vmem:[#allocation7 + $0x58] sm:$0xff]
    %v73 = vld [vmem:[#allocation7 + $0x60] sm:$0xff]
    %v74 = vld [vmem:[#allocation7 + $0x68] sm:$0xff]
    %v75 = vld [vmem:[#allocation7 + $0x70] sm:$0xff]
    %v76 = vld [vmem:[#allocation7 + $0x78] sm:$0xff]
    %v77 = vld [vmem:[#allocation5] sm:$0xff]
    %v78 = vld [vmem:[#allocation5 + $0x8] sm:$0xff]
    %v79 = vld [vmem:[%s3] sm:$0x1]
    %v81 = vlaneseq
    %v82 = vshrl.u32 %v81, 7
    %v83 = vsub.s32 0, %v82
    %v84 = vrot.slane %v79, %v83
    %86 = vmatprep.subr.mxu0 0.0
    %87 = vmatpush1.xpose.msra.mxu0 %v61
    %88 = vmatprep.subr.mxu0 0.0
    %89 = vmatpush1.xpose.msra.mxu0 %v62
    %90 = vmatprep.subr.mxu0 0.0
    %91 = vmatpush1.xpose.msra.mxu0 %v63
    %92 = vmatprep.subr.mxu0 0.0
    %93 = vmatpush1.xpose.msra.mxu0 %v64
    %94 = vmatprep.subr.mxu0 0.0
    %95 = vmatpush1.xpose.msra.mxu0 %v65
    %96 = vmatprep.subr.mxu0 0.0
    %97 = vmatpush1.xpose.msra.mxu0 %v66
    %98 = vmatprep.subr.mxu0 0.0
    %99 = vmatpush1.xpose.msra.mxu0 %v67
    %100 = vmatprep.subr.mxu0 0.0
    %101 = vmatpush1.xpose.msra.mxu0 %v68
    %102 = vmatprep.subr.mxu0 0.0
    %103 = vmatpush1.xpose.msra.mxu0 %v69
    %104 = vmatprep.subr.mxu0 0.0
    %105 = vmatpush1.xpose.msra.mxu0 %v70
    %106 = vmatprep.subr.mxu0 0.0
    %107 = vmatpush1.xpose.msra.mxu0 %v71
    %108 = vmatprep.subr.mxu0 0.0
    %109 = vmatpush1.xpose.msra.mxu0 %v72
    %110 = vmatprep.subr.mxu0 0.0
    %111 = vmatpush1.xpose.msra.mxu0 %v73
    %112 = vmatprep.subr.mxu0 0.0
    %113 = vmatpush1.xpose.msra.mxu0 %v74
    %114 = vmatprep.subr.mxu0 0.0
    %115 = vmatpush1.xpose.msra.mxu0 %v75
    %116 = vmatprep.subr.mxu0 0.0
    %117 = vmatpush1.xpose.msra.mxu0 %v76
    %118 = vmatprep.subr.mxu0 0.0
    %119 = vmatpush1.xpose.msra.mxu0 0.0
    %120 = vmatprep.subr.mxu0 0.0
    %121 = vmatpush1.xpose.msra.mxu0 0.0
    %122 = vmatprep.subr.mxu0 0.0
    %123 = vmatpush1.xpose.msra.mxu0 0.0
    %124 = vmatprep.subr.mxu0 0.0
    %125 = vmatpush1.xpose.msra.mxu0 0.0
    %126 = vmatprep.subr.mxu0 0.0
    %127 = vmatpush1.xpose.msra.mxu0 0.0
    %128 = vmatprep.subr.mxu0 0.0
    %129 = vmatpush1.xpose.msra.mxu0 0.0
    %130 = vmatprep.subr.mxu0 0.0
    %131 = vmatpush1.xpose.msra.mxu0 0.0
    %132 = vmatprep.subr.mxu0 0.0
    %133 = vmatpush1.xpose.msra.mxu0 0.0
    %134 = vmatprep.subr.mxu0 0.0
    %135 = vmatpush1.xpose.msra.mxu0 0.0
    %136 = vmatprep.subr.mxu0 0.0
    %137 = vmatpush1.xpose.msra.mxu0 0.0
    %138 = vmatprep.subr.mxu0 0.0
    %139 = vmatpush1.xpose.msra.mxu0 0.0
    %140 = vmatprep.subr.mxu0 0.0
    %141 = vmatpush1.xpose.msra.mxu0 0.0
    %142 = vmatprep.subr.mxu0 0.0
    %143 = vmatpush1.xpose.msra.mxu0 0.0
    %144 = vmatprep.subr.mxu0 0.0
    %145 = vmatpush1.xpose.msra.mxu0 0.0
    %146 = vmatprep.subr.mxu0 0.0
    %147 = vmatpush1.xpose.msra.mxu0 0.0
    %148 = vmatprep.subr.mxu0 0.0
    %149 = vmatpush1.xpose.msra.mxu0 0.0
    %150 = vmatprep.mubr.f32.mxu0 0.0
    %151 = vmatmul.mubr.f32.gmra.mrb[0].mxu0 %v59
    %v152 = vpop.f32.mrb[0].mxu0
    %v153 = vadd.f32 %v84, %v152
    %v154 = vpop.f32.mrb[0].mxu0
    %155 = vmatprep.mubr.f32.mxu0 0.0
    %156 = vmatmul.mubr.f32.gmra.mrb[0].mxu0 %v60
    %v157 = vpop.f32.mrb[0].mxu0
    %v158 = vadd.f32 %v84, %v157
    %v159 = vpop.f32.mrb[0].mxu0
    %160 = vdwg.mxu0
    %v161 = vmul.f32 %v153, %v77
    %v162 = vmul.f32 %v158, %v78
    %163 = vadd.xlane.f32.xlu0 %v161
    %v164 = vpop.xlane.xlu0 %163
    %165 = vadd.xlane.f32.xlu0 %v162
    %v166 = vpop.xlane.xlu0 %165
    %v167 = vmul.f32 %v153, %v153
    %v168 = vmul.f32 %v158, %v158
    %169 = vadd.xlane.f32.xlu0 %v167
    %v170 = vpop.xlane.xlu0 %169
    %171 = vadd.xlane.f32.xlu0 %v168
    %v172 = vpop.xlane.xlu0 %171
    %v173 = vmul.f32 %v77, %v77
    %v174 = vmul.f32 %v78, %v78
    %175 = vadd.xlane.f32.xlu0 %v173
    %v176 = vpop.xlane.xlu0 %175
    %177 = vadd.xlane.f32.xlu0 %v174
    %v178 = vpop.xlane.xlu0 %177
    %v179 = vmax.f32 %v170, 1e-16
    %v180 = vmax.f32 %v172, 1e-16
    %v181 = vrsqrt.pop %v179
    %v182 = vrsqrt.pop %v180
    %v183 = vmax.f32 %v176, 1e-16
    %v184 = vmax.f32 %v178, 1e-16
    %v185 = vrsqrt.pop %v183
    %v186 = vrsqrt.pop %v184
    %v187 = vmul.f32 %v181, %v185
    %v188 = vmul.f32 %v182, %v186
    %v189 = vmul.f32 %v164, %v187
    %v190 = vmul.f32 %v166, %v188
    %v193 = vlaneseq
    %v194 = vand.u32 %v193, 127
    %v195 = vlaneseq
    %v196 = vshrl.u32 %v195, 7
    %v197 = vsub.s32 %v194, %v196
    %v198 = vrot.slane %v189, %v197
    %v199 = vadd.s32 %v194, 4294967288
    %v200 = vlaneseq
    %v201 = vshrl.u32 %v200, 7
    %v202 = vsub.s32 %v199, %v201
    %v203 = vrot.slane %v190, %v202
    %vm204 = vcmask 130112
    %v205 = vsel %vm204, %v203, %v198
    %vm207 = vcmask 122880
    %208 = vst.msk [vmem:[#allocation8] sm:$0x1] %vm207, %v205
    // Predicated region
    $region30: #{tpu_custom_call.1} parent=1 // pred_check
      _
    $region31: #{tpu_custom_call.1} parent=1 // pred_check_branch
      %210 = sbr.rel (0) target = $region33
    $region32: #{tpu_custom_call.1} parent=1 // pred_region
      %s212 = ssub.s32 16, 16
      %213 = vsyncadd [#allocation4], %s212
      %s215 = sshll.u32 [#allocation8], 4
      %s216 = int_to_ptr.vmem [resolvable:$true] %s215
      %218 = dma.vmem_to_hbm [thread:$0]  %s216, 16, %s4, [#allocation4]
    $region33: #{tpu_custom_call.1} parent=1 // pred_fallthru
      _
    // Predicated region
    $region34: #{tpu_custom_call.1} parent=1 // pred_check
      _
    $region35: #{tpu_custom_call.1} parent=1 // pred_check_branch
      %220 = sbr.rel (0) target = $region37
    $region36: #{tpu_custom_call.1} parent=1 // pred_region
      %221 = dma.done [#allocation4], 16
    $region37: #{tpu_custom_call.1} parent=1 // pred_fallthru
      _
    %222 = vsyncpa [#allocation3], 1
    %223 = vsyncpa [#allocation6], 1
    %224 = vsyncpa [#allocation4], 1

</llo_original>
